<compile_context>
chip_gen: v7x
topology: tpu7x:2x2x1
jax: 0.10.0
libtpu: 0.0.40
codegen_flags: <defaults>
</compile_context>

<pallas_src>
import functools

import jax
import jax.numpy as jnp
from jax.experimental import pallas as pl
from jax.experimental.pallas import tpu as pltpu


# ----------------------------------------------------------------------------- kernels
def _squeeze_kernel(x_ref, g_ref, out_ref, *, inv_vw):
    # x_ref: (1, 1, C, T1) native dtype | g_ref: (C, 1) f32 | out_ref: (1, C, 1) f32 (resident)
    t = pl.program_id(1)
    partial = jnp.sum(x_ref[0, 0].astype(jnp.float32), axis=-1, keepdims=True)   # (C, 1)

    @pl.when(t == 0)
    def _():
        out_ref[0] = partial

    @pl.when(t > 0)
    def _():
        out_ref[0] = out_ref[0] + partial

    @pl.when(t == pl.num_programs(1) - 1)
    def _():
        out_ref[0] = out_ref[0] * g_ref[...] * inv_vw


def _weighted_sum_kernel(w_ref, x_ref, out_ref, *, depth):
    # w_ref: (D, 1, C, 1) f32 | x_ref: (D, 1, C, TVW) native dtype | out_ref: (1, C, TVW) native
    # Depth is tiny & static -> unrolled; accumulate in f32 vregs, cast once at the store.
    acc = x_ref[0, 0].astype(jnp.float32) * w_ref[0, 0]
    for d in range(1, depth):
        acc = acc + x_ref[d, 0].astype(jnp.float32) * w_ref[d, 0]
    out_ref[0] = acc.astype(out_ref.dtype)


# ----------------------------------------------------------------------------- sizing helpers
def _vmem_capacity_bytes(default=64 << 20):
    """Physical VMEM per core (v5e/v6e 128 MiB, v7x 64 MiB); safe fallback if unavailable."""
    try:
        info = pltpu.get_tpu_info()
        for name in ("vmem_capacity_bytes", "vmem_bytes", "vmem_size_bytes"):
            v = getattr(info, name, None)
            if v:
                return int(v)
    except Exception:
        pass
    return default


def _pick_spatial_tile(vw, bytes_per_lane, vmem_budget, max_lanes_cap=8192):
    """Largest lane-dense tile (multiple of 128) dividing VW whose working set fits the budget."""
    if vw % 128 != 0:
        # TODO(synk): pad VW up to a multiple of 128 (masked tail tile) instead of one big tile.
        return vw
    max_lanes = (vmem_budget // max(bytes_per_lane, 1)) // 128 * 128
    max_lanes = max(128, min(max_lanes_cap, max_lanes))
    t = min(vw, max_lanes)
    while vw % t != 0:
        t -= 128
    return t


# ----------------------------------------------------------------------------- wrapper
def attn_layer(xs, all_squeezed_prev, gamma, *, num_heads, temperature=1.0, query_idx=-1):
    """Pallas implementation of AttnLayer.forward.

    xs               : (D, B, C, V, W)   stack of feature maps (any float dtype)
    all_squeezed_prev: (D-1, B, C)       previously accumulated squeezes
    gamma            : (C,)              LayerScaler weights
    returns (x_new (B, C, V, W) in xs.dtype, all_squeezed (D, B, C) in f32)
    """
    D, B, C, V, W = xs.shape
    assert C % num_heads == 0
    head_dim = C // num_heads
    VW = V * W
    x_bytes = jnp.dtype(xs.dtype).itemsize

    # Per-generation VMEM sizing (explicit vmem_limit_bytes, tile that fits with headroom).
    vmem_cap = _vmem_capacity_bytes()
    vmem_limit = min(int(vmem_cap * 3 // 4), 100 << 20)
    tile_budget = max(vmem_limit - (4 << 20), 4 << 20)

    # Pure layout glue — NO dtype cast: xs streams through the kernels at native dtype.
    xs4 = xs.reshape(D, B, C, VW)
    gamma_col = gamma.reshape(C, 1).astype(jnp.float32)

    # --- K1: squeeze = spatial mean of xs[-1], scaled by gamma ----------------------------
    t1 = _pick_spatial_tile(VW, bytes_per_lane=2 * C * x_bytes, vmem_budget=tile_budget)
    k1 = functools.partial(_squeeze_kernel, inv_vw=1.0 / float(VW))
    squeezed_col = pl.pallas_call(
        k1,
        out_shape=jax.ShapeDtypeStruct((B, C, 1), jnp.float32),
        grid_spec=pltpu.PrefetchScalarGridSpec(
            num_scalar_prefetch=0,
            grid=(B, VW // t1),
            in_specs=[
                # read the last depth slab straight from xs (no wrapper-side slice copy)
                pl.BlockSpec((1, 1, C, t1), lambda b, t: (D - 1, b, 0, t)),
                pl.BlockSpec((C, 1), lambda b, t: (0, 0)),
            ],
            out_specs=pl.BlockSpec((1, C, 1), lambda b, t: (b, 0, 0)),
        ),
        compiler_params=pltpu.CompilerParams(
            dimension_semantics=("parallel", "arbitrary"),
            vmem_limit_bytes=vmem_limit),
    )(xs4, gamma_col)
    squeezed = squeezed_col[..., 0]                                         # (B, C)

    # torch.cat + tiny per-depth softmax: plain JAX (O(D*B*C), fuses with the concat).
    all_squeezed = jnp.concatenate(
        [all_squeezed_prev.astype(jnp.float32), squeezed[None]], axis=0)    # (D, B, C)
    assert all_squeezed.shape[0] == D, "xs depth must equal len(all_squeezed_prev)+1"
    q_idx = query_idx % D

    qh = all_squeezed[q_idx].reshape(B, num_heads, head_dim)
    kh = all_squeezed.reshape(D, B, num_heads, head_dim)
    logits = jnp.einsum("beh,dbeh->dbe", qh, kh) / float(temperature)       # (D, B, heads)
    attn = jax.nn.softmax(logits, axis=0)
    # expand per-head weight to per-channel, add trailing broadcast axis -> (D, B, C, 1)
    w_exp = jnp.broadcast_to(
        attn[..., None], (D, B, num_heads, head_dim)).reshape(D, B, C)[..., None]

    # --- K3: x_new[b,c,s] = sum_d w[d,b,c] * xs[d,b,c,s] ----------------------------------
    per_lane = 2 * D * C * x_bytes + 2 * C * x_bytes       # double-buffered xs block + out block
    tvw = _pick_spatial_tile(VW, bytes_per_lane=per_lane, vmem_budget=tile_budget)
    T = VW // tvw
    k3 = functools.partial(_weighted_sum_kernel, depth=D)
    out3 = pl.pallas_call(
        k3,
        out_shape=jax.ShapeDtypeStruct((B, C, VW), xs.dtype),
        grid_spec=pltpu.PrefetchScalarGridSpec(
            num_scalar_prefetch=0,
            grid=(B, T),                                    # depth reduction folded in-kernel
            in_specs=[
                # weight block index depends only on b -> DMA re-issued only when b changes
                pl.BlockSpec((D, 1, C, 1), lambda b, t: (0, b, 0, 0)),
                pl.BlockSpec((D, 1, C, tvw), lambda b, t: (0, b, 0, t)),
            ],
            out_specs=pl.BlockSpec((1, C, tvw), lambda b, t: (b, 0, t)),
        ),
        compiler_params=pltpu.CompilerParams(
            dimension_semantics=("parallel", "parallel"),   # both axes independent (megacore)
            vmem_limit_bytes=vmem_limit),
    )(w_exp, xs4)

    x_new = out3.reshape(B, C, V, W)
    return x_new, all_squeezed


# ----------------------------------------------------------------------------- reference
def attn_layer_reference(xs, all_squeezed_prev, gamma, num_heads, temperature, query_idx=-1):
    """Pure-JAX mirror of the PyTorch AttnLayer.forward."""
    D, B, C, V, W = xs.shape
    hd = C // num_heads
    xs_f = xs.astype(jnp.float32)
    squeezed = jnp.mean(xs_f[-1], axis=(-2, -1)) * gamma                     # (B, C)
    all_squeezed = jnp.concatenate([all_squeezed_prev, squeezed[None]], 0)   # (D, B, C)
    query = all_squeezed[query_idx]                                          # (B, C)
    qh = query.reshape(B, num_heads, hd)
    kh = all_squeezed.reshape(D, B, num_heads, hd)
    attn = jnp.einsum("beh,dbeh->dbe", qh, kh) / temperature
    attn = jax.nn.softmax(attn, axis=0)                                      # (D, B, E)
    xs_h = xs_f.reshape(D, B, num_heads, hd, V, W)
    x_new = jnp.einsum("dbehvw,dbe->behvw", xs_h, attn).reshape(B, C, V, W)
    return x_new.astype(xs.dtype), all_squeezed


# ----------------------------------------------------------------------------- demo
if __name__ == "__main__":
    D, B, C, V, W = 3, 2, 32, 16, 16
    num_heads = 4
    temperature = 0.7

    key = jax.random.PRNGKey(0)
    k1, k2, k3 = jax.random.split(key, 3)
    xs = jax.random.normal(k1, (D, B, C, V, W), dtype=jnp.float32)
    all_squeezed_prev = jax.random.normal(k2, (D - 1, B, C), dtype=jnp.float32)
    # LayerScaler weight (init_scale * ones at init; random here to exercise the multiply)
    gamma = 1.0 + 0.1 * jax.random.normal(k3, (C,), dtype=jnp.float32)

    x_new, all_sq = attn_layer(
        xs, all_squeezed_prev, gamma,
        num_heads=num_heads, temperature=temperature, query_idx=-1)
    x_new = jax.block_until_ready(x_new)
    all_sq = jax.block_until_ready(all_sq)

    x_ref, sq_ref = attn_layer_reference(
        xs, all_squeezed_prev, gamma, num_heads, temperature, query_idx=-1)

    assert x_new.shape == (B, C, V, W), x_new.shape
    assert all_sq.shape == (D, B, C), all_sq.shape
    if not bool(jnp.allclose(all_sq, sq_ref, atol=1e-4, rtol=1e-4)):
        raise AssertionError("all_squeezed mismatch vs reference")
    if not bool(jnp.allclose(x_new, x_ref, atol=2e-3, rtol=2e-3)):
        raise AssertionError("x_new mismatch vs reference")
    print("KERNEL_OK")
</pallas_src>

<mosaic_0001>
module attributes {stable_mosaic.version = 11 : i64} {
  func.func @_squeeze_kernel(%arg0: i32, %arg1: i32, %arg2: memref<1x1x32x256xf32, #tpu.memory_space<vmem>>, %arg3: memref<32x1xf32, #tpu.memory_space<vmem>>, %arg4: memref<1x32x1xf32, #tpu.memory_space<vmem>>) attributes {dimension_semantics = [#tpu.dimension_semantics<parallel>, #tpu.dimension_semantics<arbitrary>], iteration_bounds = array<i64: 2, 1>, scalar_prefetch = 0 : i64, scratch_operands = 0 : i64, tpu.core_type = #tpu.core_type<tc>, window_params = [{transform_indices = @transform_0, window_bounds = array<i64: 1, 1, 32, 256>}, {pipeline_mode = #tpu.pipeline_mode<synchronous>, transform_indices = @transform_1, window_bounds = array<i64: 32, 1>}, {transform_indices = @transform_2, window_bounds = array<i64: 1, 32, 1>}]} {
    %c0 = arith.constant 0 : index
    %c0_0 = arith.constant 0 : index
    %c0_1 = arith.constant 0 : index
    %c0_2 = arith.constant 0 : index
    %0 = vector.load %arg2[%c0, %c0_0, %c0_1, %c0_2] : memref<1x1x32x256xf32, #tpu.memory_space<vmem>>, vector<1x1x32x256xf32>
    %1 = vector.shape_cast %0 : vector<1x1x32x256xf32> to vector<32x256xf32>
    %cst = arith.constant dense<0.000000e+00> : vector<32xf32>
    %2 = vector.multi_reduction <add>, %1, %cst [1] : vector<32x256xf32> to vector<32xf32>
    %3 = vector.shape_cast %2 : vector<32xf32> to vector<32x1xf32>
    %c0_i32 = arith.constant 0 : i32
    %4 = arith.cmpi eq, %arg1, %c0_i32 : i32
    %5 = arith.extui %4 : i1 to i32
    %c0_i32_3 = arith.constant 0 : i32
    %6 = arith.cmpi ne, %5, %c0_i32_3 : i32
    scf.if %6 {
      %c0_8 = arith.constant 0 : index
      %c0_9 = arith.constant 0 : index
      %c0_10 = arith.constant 0 : index
      %13 = vector.load %arg4[%c0_8, %c0_9, %c0_10] : memref<1x32x1xf32, #tpu.memory_space<vmem>>, vector<1x32x1xf32>
      %14 = vector.shape_cast %13 : vector<1x32x1xf32> to vector<32x1xf32>
      %15 = vector.shape_cast %3 : vector<32x1xf32> to vector<1x32x1xf32>
      tpu.vector_store %arg4[%c0_8, %c0_9, %c0_10], %15 {strides = array<i32>} : memref<1x32x1xf32, #tpu.memory_space<vmem>>, vector<1x32x1xf32>,
    } else {
    }
    %c0_i32_4 = arith.constant 0 : i32
    %7 = arith.cmpi sgt, %arg1, %c0_i32_4 : i32
    %8 = arith.extui %7 : i1 to i32
    %c0_i32_5 = arith.constant 0 : i32
    %9 = arith.cmpi ne, %8, %c0_i32_5 : i32
    scf.if %9 {
      %c0_8 = arith.constant 0 : index
      %c0_9 = arith.constant 0 : index
      %c0_10 = arith.constant 0 : index
      %13 = vector.load %arg4[%c0_8, %c0_9, %c0_10] : memref<1x32x1xf32, #tpu.memory_space<vmem>>, vector<1x32x1xf32>
      %14 = vector.shape_cast %13 : vector<1x32x1xf32> to vector<32x1xf32>
      %15 = arith.addf %14, %3 : vector<32x1xf32>
      %c0_11 = arith.constant 0 : index
      %c0_12 = arith.constant 0 : index
      %c0_13 = arith.constant 0 : index
      %16 = vector.load %arg4[%c0_11, %c0_12, %c0_13] : memref<1x32x1xf32, #tpu.memory_space<vmem>>, vector<1x32x1xf32>
      %17 = vector.shape_cast %16 : vector<1x32x1xf32> to vector<32x1xf32>
      %18 = vector.shape_cast %15 : vector<32x1xf32> to vector<1x32x1xf32>
      tpu.vector_store %arg4[%c0_11, %c0_12, %c0_13], %18 {strides = array<i32>} : memref<1x32x1xf32, #tpu.memory_space<vmem>>, vector<1x32x1xf32>,
    } else {
    }
    %c0_i32_6 = arith.constant 0 : i32
    %10 = arith.cmpi eq, %arg1, %c0_i32_6 : i32
    %11 = arith.extui %10 : i1 to i32
    %c0_i32_7 = arith.constant 0 : i32
    %12 = arith.cmpi ne, %11, %c0_i32_7 : i32
    scf.if %12 {
      %c0_8 = arith.constant 0 : index
      %c0_9 = arith.constant 0 : index
      %c0_10 = arith.constant 0 : index
      %13 = vector.load %arg4[%c0_8, %c0_9, %c0_10] : memref<1x32x1xf32, #tpu.memory_space<vmem>>, vector<1x32x1xf32>
      %14 = vector.shape_cast %13 : vector<1x32x1xf32> to vector<32x1xf32>
      %c0_11 = arith.constant 0 : index
      %c0_12 = arith.constant 0 : index
      %15 = vector.load %arg3[%c0_11, %c0_12] : memref<32x1xf32, #tpu.memory_space<vmem>>, vector<32x1xf32>
      %16 = arith.mulf %14, %15 : vector<32x1xf32>
      %cst_13 = arith.constant 3.906250e-03 : f32
      %17 = vector.broadcast %cst_13 : f32 to vector<32x1xf32>
      %18 = arith.mulf %16, %17 : vector<32x1xf32>
      %c0_14 = arith.constant 0 : index
      %c0_15 = arith.constant 0 : index
      %c0_16 = arith.constant 0 : index
      %19 = vector.load %arg4[%c0_14, %c0_15, %c0_16] : memref<1x32x1xf32, #tpu.memory_space<vmem>>, vector<1x32x1xf32>
      %20 = vector.shape_cast %19 : vector<1x32x1xf32> to vector<32x1xf32>
      %21 = vector.shape_cast %18 : vector<32x1xf32> to vector<1x32x1xf32>
      tpu.vector_store %arg4[%c0_14, %c0_15, %c0_16], %21 {strides = array<i32>} : memref<1x32x1xf32, #tpu.memory_space<vmem>>, vector<1x32x1xf32>,
    } else {
    }
    return
  }
  func.func @transform_0(%arg0: i32, %arg1: i32) -> (i32, i32, i32, i32) {
    %c2_i32 = arith.constant 2 : i32
    %c0_i32 = arith.constant 0 : i32
    %c0_i32_0 = arith.constant 0 : i32
    return %c2_i32, %arg0, %c0_i32, %arg1 : i32, i32, i32, i32
  }
  func.func @transform_1(%arg0: i32, %arg1: i32) -> (i32, i32) {
    %c0_i32 = arith.constant 0 : i32
    %c0_i32_0 = arith.constant 0 : i32
    %c0_i32_1 = arith.constant 0 : i32
    return %c0_i32, %c0_i32_0 : i32, i32
  }
  func.func @transform_2(%arg0: i32, %arg1: i32) -> (i32, i32, i32) {
    %c0_i32 = arith.constant 0 : i32
    %c0_i32_0 = arith.constant 0 : i32
    %c0_i32_1 = arith.constant 0 : i32
    return %arg0, %c0_i32, %c0_i32_0 : i32, i32, i32
  }
}

</mosaic_0001>

<llo_original>
// kernel: tpu_custom_call.1
$region0: #{tpu_custom_call.1}
  #allocation0 [shape = 'u32[]', space=smem, size = 0x4, offset = 0x4, fixed_abs, tag = 'smem constant byte address 0x4 - core index']
  #allocation1 [shape = 'u32[144,128]{1,0:T(1,128)}', space=vmem, size = 0x12000, scoped, tag = 'internal scratch']
  %s0 = inlined_call_operand.hbm [shape: f32[3,2,32,256], index: 0, kind: input, shape index: {}]
  %s1 = inlined_call_operand.vmem [shape: f32[32,1], index: 1, kind: input, shape index: {}]
  %s2 = inlined_call_operand.vmem [shape: f32[2,32,1], index: 2, kind: output, shape index: {}]
  %s3 = sld [smem:[#allocation0]]
  $region57: #{tpu_custom_call.1} parent=0
    _
  %s5 = ssub.s32 1, %s3
  %s6 = scalar_select 0, %s5, %s3
  $region1: #{tpu_custom_call.1} parent=0
    #allocation2 [shape = 'u8[65536]{0}', space=vmem, size = 0x10000, scoped, tag = 'input window, operand 0']
    #allocation3 [shape = 's32[2]{0}', space=sflag, size = 0x8, scoped, tag = 'scoped memory for tpu_custom_call.1']
    %7 = vsyncpa [#allocation3], 0
    %s8 = scalar_lea.sflag [#allocation3], 1
    %9 = vsyncpa %s8, 0
    loop: start=0, step=1, limit=4
    $region2: #{tpu_custom_call.1} parent=1 // loop_pre_header
      _
    $region3: #{tpu_custom_call.1} parent=1 // loop_header
      %s11 = sphi 0, %s15
      %p12 = scmp.ge.s32.totalorder %s11, 4
      %s18 = sphi 0, %s30
      %s19 = sphi 0, %s26
      %s20 = sphi 0, %s18
      %s21 = sphi 0, %s19
      %s22 = sphi 0, %s20
      %s23 = sphi 0, %s21
      %s35 = sphi 0, %s37
      %s38 = sphi 0, %s35
      %s39 = sphi 0, %s38
      %s55 = sphi 0, %s39
      %s59 = sphi 0, %s59
      %s61 = sphi 0, %s59
      %s62 = sphi 0, %s61
      %s76 = sphi 0, %s62
      %s82 = sphi 0, %s84
      %s85 = sphi 0, %s82
      %s86 = sphi 0, %s85
      %s102 = sphi 0, %s86
    $region4: #{tpu_custom_call.1} parent=1 // loop_header_branch
      %14 = sbr.rel (%p12) target = $region8
    $region5: #{tpu_custom_call.1} parent=1 // loop_body
      %s16 = ssub.s32 %s11, 1
      %s17 = ssub.s32 %s11, 2
      %s24 = sadd.s32 1, %s19
      %p25 = scmp.ge.s32.totalorder %s24, 1
      %s26 = scalar_select %p25, 0, %s24
      %s27 = sadd.s32 1, %s18
      %s28 = scalar_select %p25, %s27, %s18
      %p29 = scmp.ge.s32.totalorder %s28, 2
      %s30 = scalar_select %p29, 0, %s28
      %s31 = ssub.s32 %s18, %s30
      %s32 = ssub.s32 %s19, %s26
      %s33 = sor.u32 %s31, %s32
      %p34 = scmp.eq.s32.totalorder %s33, 0
      %s36 = sadd.s32 %s35, 1
      %s37 = scalar_select %p34, %s35, %s36
      %p40 = pneg %p34
      %p41 = scmp.eq.s32.totalorder %s11, 1
      %p42 = por %p40, %p41
      %p43 = scmp.ne.s32.totalorder %s35, %s38
      %p44 = scmp.eq.s32.totalorder %s11, 0
      %p45 = por %p43, %p44
      %p46 = scmp.ne.s32.totalorder %s35, %s38
      %p47 = scmp.eq.s32.totalorder %s16, 1
      %p48 = por %p46, %p47
      %p49 = scmp.ne.s32.totalorder %s38, %s39
      %p50 = scmp.eq.s32.totalorder %s16, 0
      %p51 = por %p49, %p50
      %p52 = scmp.ne.s32.totalorder %s38, %s39
      %p53 = scmp.eq.s32.totalorder %s17, 1
      %p54 = por %p52, %p53
      %p56 = scmp.ne.s32.totalorder %s39, %s55
      %p57 = scmp.eq.s32.totalorder %s17, 0
      %p58 = por %p56, %p57
      %s60 = sadd.s32 %s59, 1
      %p63 = scmp.eq.s32.totalorder %s11, 1
      %p64 = scmp.ne.s32.totalorder %s59, %s61
      %p65 = scmp.eq.s32.totalorder %s11, 0
      %p66 = por %p64, %p65
      %p67 = scmp.ne.s32.totalorder %s59, %s61
      %p68 = scmp.eq.s32.totalorder %s16, 1
      %p69 = por %p67, %p68
      %p70 = scmp.ne.s32.totalorder %s61, %s62
      %p71 = scmp.eq.s32.totalorder %s16, 0
      %p72 = por %p70, %p71
      %p73 = scmp.ne.s32.totalorder %s61, %s62
      %p74 = scmp.eq.s32.totalorder %s17, 1
      %p75 = por %p73, %p74
      %p77 = scmp.ne.s32.totalorder %s62, %s76
      %p78 = scmp.eq.s32.totalorder %s17, 0
      %p79 = por %p77, %p78
      %s80 = ssub.s32 %s18, %s30
      %p81 = scmp.eq.s32.totalorder %s80, 0
      %s83 = sadd.s32 %s82, 1
      %s84 = scalar_select %p81, %s82, %s83
      %p87 = pneg %p81
      %p88 = scmp.eq.s32.totalorder %s11, 1
      %p89 = por %p87, %p88
      %p90 = scmp.ne.s32.totalorder %s82, %s85
      %p91 = scmp.eq.s32.totalorder %s11, 0
      %p92 = por %p90, %p91
      %p93 = scmp.ne.s32.totalorder %s82, %s85
      %p94 = scmp.eq.s32.totalorder %s16, 1
      %p95 = por %p93, %p94
      %p96 = scmp.ne.s32.totalorder %s85, %s86
      %p97 = scmp.eq.s32.totalorder %s16, 0
      %p98 = por %p96, %p97
      %p99 = scmp.ne.s32.totalorder %s85, %s86
      %p100 = scmp.eq.s32.totalorder %s17, 1
      %p101 = por %p99, %p100
      %p103 = scmp.ne.s32.totalorder %s86, %s102
      %p104 = scmp.eq.s32.totalorder %s17, 0
      %p105 = por %p103, %p104
      %p106 = scmp.le.s32.totalorder 1, %s11
      %p107 = scmp.lt.s32.totalorder %s11, 3
      %p108 = pnand %p106, %p107
      %p109 = pneg %p108
      // Predicated region
      $region9: #{tpu_custom_call.1} parent=5 // pred_check
        _
      $region10: #{tpu_custom_call.1} parent=5 // pred_check_branch
        %111 = sbr.rel (%p108) target = $region12
      $region11: #{tpu_custom_call.1} parent=5 // pred_region
        %s112 = ssub.s32 %s11, 1
        // Predicated region
        $region13: #{tpu_custom_call.1} parent=11 // pred_check
          %p113 = pneg %p72
        $region14: #{tpu_custom_call.1} parent=11 // pred_check_branch
          %115 = sbr.rel (%p113) target = $region16
        $region15: #{tpu_custom_call.1} parent=11 // pred_region
          _
        $region16: #{tpu_custom_call.1} parent=11 // pred_fallthru
          _
      $region12: #{tpu_custom_call.1} parent=5 // pred_fallthru
        _
      %p116 = scmp.lt.s32.totalorder %s11, 2
      // Predicated region
      $region17: #{tpu_custom_call.1} parent=5 // pred_check
        %p117 = pneg %p116
      $region18: #{tpu_custom_call.1} parent=5 // pred_check_branch
        %119 = sbr.rel (%p117) target = $region20
      $region19: #{tpu_custom_call.1} parent=5 // pred_region
        // Predicated region
        $region21: #{tpu_custom_call.1} parent=19 // pred_check
          %p120 = pneg %p45
        $region22: #{tpu_custom_call.1} parent=19 // pred_check_branch
          %122 = sbr.rel (%p120) target = $region24
        $region23: #{tpu_custom_call.1} parent=19 // pred_region
          %s123 = sand.u32 %s35, 1
          %s124 = scalar_lea.sflag [#allocation3], %s123
          %s125 = sand.u32 %s35, 1
          %s126 = smul.addr %s125, 64
          %s127 = scalar_lea.vmem [#allocation2], %s126
          %s128 = smul.u32 2, %s19
          %s130 = ssub.s32 1024, 1024
          %131 = vsyncadd %s124, %s130
          %s132 = smul.addr %s18, 8
          %s133 = sadd.s32 %s128, %s132
          %s134 = sadd.s32 %s133, 32
          %s135 = smul.addr %s134, 128
          %s136 = scalar_lea.hbm %s0, %s135
          %s137 = sshll.u32 %s127, 4
          %s138 = int_to_ptr.vmem [resolvable:$true] %s137
          %143 = dma.hbm_to_vmem [thread:$0]  %s136, 1024, %s138, %s124, 256, 256, 16
        $region24: #{tpu_custom_call.1} parent=19 // pred_fallthru
          _
      $region20: #{tpu_custom_call.1} parent=5 // pred_fallthru
        _
      %p144 = scmp.le.s32.totalorder 1, %s11
      %p145 = scmp.lt.s32.totalorder %s11, 3
      %p146 = pnand %p144, %p145
      %p147 = pneg %p146
      // Predicated region
      $region25: #{tpu_custom_call.1} parent=5 // pred_check
        _
      $region26: #{tpu_custom_call.1} parent=5 // pred_check_branch
        %149 = sbr.rel (%p146) target = $region28
      $region27: #{tpu_custom_call.1} parent=5 // pred_region
        %s150 = ssub.s32 %s11, 1
        %s151 = sand.u32 %s38, 1
        %s152 = scalar_lea.sflag [#allocation3], %s151
        %s153 = sand.u32 %s38, 1
        %s154 = smul.addr %s153, 64
        %s155 = scalar_lea.vmem [#allocation2], %s154
        // Predicated region
        $region29: #{tpu_custom_call.1} parent=27 // pred_check
          %p156 = pneg %p51
        $region30: #{tpu_custom_call.1} parent=27 // pred_check_branch
          %158 = sbr.rel (%p156) target = $region32
        $region31: #{tpu_custom_call.1} parent=27 // pred_region
          %159 = dma.done %s152, 1024
        $region32: #{tpu_custom_call.1} parent=27 // pred_fallthru
          _
        %s160 = sand.u32 %s38, 1
        %s161 = scalar_lea.sflag [#allocation3], %s160
        %s162 = sand.u32 %s38, 1
        %s163 = smul.addr %s162, 64
        %s164 = scalar_lea.vmem [#allocation2], %s163
        %p165 = pneg %p51
        %p166 = pneg %p48
        %p167 = pneg %p72
        %p168 = pneg %p69
        %p169 = pneg %p98
        %p170 = pneg %p95
        %p171 = scmp.lt.s32.totalorder %s20, 1
        %s172 = scalar_select %p171, %s20, 1
        %s173 = smul.addr %s172, 4
        %s174 = smul.addr %s173, 8
        %s175 = scalar_lea.vmem %s2, %s174
        %s176 = smul.u32 2, %s21
        %p177 = scmp.lt.s32.totalorder %s20, 1
        %s178 = scalar_select %p177, %s20, 1
        %s179 = smul.addr %s178, 4
        %s180 = smul.addr %s179, 8
        %s181 = scalar_lea.vmem %s2, %s180
        %v182 = vld [vmem:[%s155] sm:$0xff]
        %v183 = vld [vmem:[%s155 + $0x8] sm:$0xff]
        %v184 = vld [vmem:[%s155 + $0x10] sm:$0xff]
        %v185 = vld [vmem:[%s155 + $0x18] sm:$0xff]
        %v186 = vld [vmem:[%s155 + $0x20] sm:$0xff]
        %v187 = vld [vmem:[%s155 + $0x28] sm:$0xff]
        %v188 = vld [vmem:[%s155 + $0x30] sm:$0xff]
        %v189 = vld [vmem:[%s155 + $0x38] sm:$0xff]
        %v190 = vadd.f32 %v182, %v183
        %191 = vadd.xlane.f32.xlu0 %v190
        %v192 = vpop.xlane.xlu0 %191
        %v193 = vadd.f32 %v184, %v185
        %194 = vadd.xlane.f32.xlu0 %v193
        %v195 = vpop.xlane.xlu0 %194
        %v196 = vadd.f32 %v186, %v187
        %197 = vadd.xlane.f32.xlu0 %v196
        %v198 = vpop.xlane.xlu0 %197
        %v199 = vadd.f32 %v188, %v189
        %200 = vadd.xlane.f32.xlu0 %v199
        %v201 = vpop.xlane.xlu0 %200
        %p202 = scmp.eq.s32.totalorder %s21, 0
        // Predicated region
        $region33: #{tpu_custom_call.1} parent=27 // pred_check
          %p203 = pneg %p202
        $region34: #{tpu_custom_call.1} parent=27 // pred_check_branch
          %205 = sbr.rel (%p203) target = $region36
        $region35: #{tpu_custom_call.1} parent=27 // pred_region
          %vm206 = vcmask 7168
          %207 = vst.msk [vmem:[%s181] sm:$0xff] %vm206, %v192
          %208 = vst.msk [vmem:[%s181 + $0x8] sm:$0xff] %vm206, %v195
          %209 = vst.msk [vmem:[%s181 + $0x10] sm:$0xff] %vm206, %v198
          %210 = vst.msk [vmem:[%s181 + $0x18] sm:$0xff] %vm206, %v201
        $region36: #{tpu_custom_call.1} parent=27 // pred_fallthru
          _
        %p211 = scmp.gt.s32.totalorder %s21, 0
        // Predicated region
        $region37: #{tpu_custom_call.1} parent=27 // pred_check
          %p212 = pneg %p211
        $region38: #{tpu_custom_call.1} parent=27 // pred_check_branch
          %214 = sbr.rel (%p212) target = $region40
        $region39: #{tpu_custom_call.1} parent=27 // pred_region
          %v215 = vld [vmem:[%s181] sm:$0xff]
          %v216 = vld [vmem:[%s181 + $0x8] sm:$0xff]
          %v217 = vld [vmem:[%s181 + $0x10] sm:$0xff]
          %v218 = vld [vmem:[%s181 + $0x18] sm:$0xff]
          %v219 = vadd.f32 %v215, %v192
          %v220 = vadd.f32 %v216, %v195
          %v221 = vadd.f32 %v217, %v198
          %v222 = vadd.f32 %v218, %v201
          %vm223 = vcmask 7168
          %224 = vst.msk [vmem:[%s181] sm:$0xff] %vm223, %v219
          %225 = vst.msk [vmem:[%s181 + $0x8] sm:$0xff] %vm223, %v220
          %226 = vst.msk [vmem:[%s181 + $0x10] sm:$0xff] %vm223, %v221
          %227 = vst.msk [vmem:[%s181 + $0x18] sm:$0xff] %vm223, %v222
        $region40: #{tpu_custom_call.1} parent=27 // pred_fallthru
          _
        // Predicated region
        $region41: #{tpu_custom_call.1} parent=27 // pred_check
          %p228 = pneg %p202
        $region42: #{tpu_custom_call.1} parent=27 // pred_check_branch
          %230 = sbr.rel (%p228) target = $region44
        $region43: #{tpu_custom_call.1} parent=27 // pred_region
          %v231 = vld [vmem:[%s181] sm:$0xff]
          %v232 = vld [vmem:[%s181 + $0x8] sm:$0xff]
          %v233 = vld [vmem:[%s181 + $0x10] sm:$0xff]
          %v234 = vld [vmem:[%s181 + $0x18] sm:$0xff]
          %v235 = vld [vmem:[%s1] sm:$0xff]
          %v236 = vld [vmem:[%s1 + $0x8] sm:$0xff]
          %v237 = vld [vmem:[%s1 + $0x10] sm:$0xff]
          %v238 = vld [vmem:[%s1 + $0x18] sm:$0xff]
          %v239 = vmul.f32 %v231, %v235
          %v240 = vmul.f32 %v232, %v236
          %v241 = vmul.f32 %v233, %v237
          %v242 = vmul.f32 %v234, %v238
          %v243 = vmul.f32 %v239, 0.00390625
          %v244 = vmul.f32 %v240, 0.00390625
          %v245 = vmul.f32 %v241, 0.00390625
          %v246 = vmul.f32 %v242, 0.00390625
          %vm247 = vcmask 7168
          %248 = vst.msk [vmem:[%s181] sm:$0xff] %vm247, %v243
          %249 = vst.msk [vmem:[%s181 + $0x8] sm:$0xff] %vm247, %v244
          %250 = vst.msk [vmem:[%s181 + $0x10] sm:$0xff] %vm247, %v245
          %251 = vst.msk [vmem:[%s181 + $0x18] sm:$0xff] %vm247, %v246
        $region44: #{tpu_custom_call.1} parent=27 // pred_fallthru
          _
        %p252 = scmp.lt.s32.totalorder %s20, 1
        %s253 = scalar_select %p252, %s20, 1
        %s254 = smul.addr %s253, 4
        %s255 = smul.addr %s254, 8
        %s256 = scalar_lea.vmem %s2, %s255
        // Predicated region
        $region45: #{tpu_custom_call.1} parent=27 // pred_check
          %p257 = pneg %p95
        $region46: #{tpu_custom_call.1} parent=27 // pred_check_branch
          %259 = sbr.rel (%p257) target = $region48
        $region47: #{tpu_custom_call.1} parent=27 // pred_region
          _
        $region48: #{tpu_custom_call.1} parent=27 // pred_fallthru
          _
      $region28: #{tpu_custom_call.1} parent=5 // pred_fallthru
        _
      %p260 = scmp.le.s32.totalorder 2, %s11
      // Predicated region
      $region49: #{tpu_custom_call.1} parent=5 // pred_check
        %p261 = pneg %p260
      $region50: #{tpu_custom_call.1} parent=5 // pred_check_branch
        %263 = sbr.rel (%p261) target = $region52
      $region51: #{tpu_custom_call.1} parent=5 // pred_region
        %s264 = ssub.s32 %s11, 2
        // Predicated region
        $region53: #{tpu_custom_call.1} parent=51 // pred_check
          %p265 = pneg %p101
        $region54: #{tpu_custom_call.1} parent=51 // pred_check_branch
          %267 = sbr.rel (%p265) target = $region56
        $region55: #{tpu_custom_call.1} parent=51 // pred_region
          %p268 = scmp.lt.s32.totalorder %s22, 1
          %s269 = scalar_select %p268, %s22, 1
          %s270 = smul.addr %s269, 4
          %s271 = smul.addr %s270, 8
          %s272 = scalar_lea.vmem %s2, %s271
        $region56: #{tpu_custom_call.1} parent=51 // pred_fallthru
          _
      $region52: #{tpu_custom_call.1} parent=5 // pred_fallthru
        _
    $region6: #{tpu_custom_call.1} parent=1 // loop_footer
      %s15 = sadd.s32 1, %s11
    $region7: #{tpu_custom_call.1} parent=1 // loop_footer_branch
      %10 = sbr.rel target = $region3
    $region8: #{tpu_custom_call.1} parent=1 // loop_exit
      _
    %273 = vsyncpa [#allocation3], 1
    %s274 = scalar_lea.sflag [#allocation3], 1
    %275 = vsyncpa %s274, 1

</llo_original>
